<compile_context>
chip_gen: v6e
topology: v6e:2x2x1
jax: 0.10.0
libtpu: 0.0.40
codegen_flags: <defaults>
</compile_context>

<pallas_src>
import jax
import jax.numpy as jnp
from jax.experimental import pallas as pl
from jax.experimental.pallas import tpu as pltpu


def _mlp(x_bf16, wa_ref, ba_ref, wb_ref, bb_ref):
    """Sequential(Linear, ReLU, Linear, ReLU): bf16 MXU inputs, f32 accum/elementwise."""
    h = jnp.dot(x_bf16, wa_ref[...], preferred_element_type=jnp.float32) + ba_ref[...]
    h = jnp.maximum(h, 0.0)
    o = jnp.dot(h.astype(jnp.bfloat16), wb_ref[...],
                preferred_element_type=jnp.float32) + bb_ref[...]
    return jnp.maximum(o, 0.0)


def cicr_kernel(
    # batch-tiled bf16 activations
    claims_ref, claim_ev_ref, evid_ref,
    # VMEM-resident parameters (pre-transposed bf16 weights, f32 biases)
    du_ref, a_ref, ba_ref, w3t_ref, b3_ref,
    wc_at_ref, bc_a_ref, wc_bt_ref, bc_b_ref,
    we_at_ref, be_a_ref, we_bt_ref, be_b_ref,
    wf_at_ref, bf_a_ref, wf_bt_ref, bf_b_ref,
    # stacked output [3, TB, C]: (res_claim, res_evidence, res_fusion)
    out_ref,
):
    claims = claims_ref[...]                                              # bf16 [TB, F]

    # ---- claim_intervention ----
    # logits = (claims @ W1^T + b1) @ K^T == claims @ A + bA  (A, bA precomputed).
    logits = jnp.dot(claims, a_ref[...],
                     preferred_element_type=jnp.float32) + ba_ref[...]    # [TB, C] f32
    logits = logits - jnp.max(logits, axis=-1, keepdims=True)
    e = jnp.exp(logits)
    w = e * pl.reciprocal(jnp.sum(e, axis=-1, keepdims=True), approx=True)
    e_du = jnp.dot(w.astype(jnp.bfloat16), du_ref[...],
                   preferred_element_type=jnp.float32)                    # [TB, F] f32
    ci_in = (claims.astype(jnp.float32) + e_du).astype(jnp.bfloat16)      # one cast at MXU input
    claims_iv = jnp.dot(ci_in, w3t_ref[...],
                        preferred_element_type=jnp.float32) + b3_ref[...]  # [TB, F] f32

    # ---- three classifiers (Linear-ReLU-Linear-ReLU) -> one stacked slab ----
    out_ref[0] = _mlp(claims_iv.astype(jnp.bfloat16), wc_at_ref, bc_a_ref, wc_bt_ref, bc_b_ref)
    out_ref[1] = _mlp(evid_ref[...], we_at_ref, be_a_ref, we_bt_ref, be_b_ref)
    out_ref[2] = _mlp(claim_ev_ref[...], wf_at_ref, bf_a_ref, wf_bt_ref, bf_b_ref)


def _pick_batch_tile(B, tb):
    """Batch tile TB and grid size; keeps grid even when possible (v7x 2 TCs)."""
    if B <= tb:
        return B, 1                      # single block == full array dims
    TB = max(8, (tb // 8) * 8)           # sublane multiple
    gb = pl.cdiv(B, TB)
    if gb > 1 and gb % 2 == 1:           # prefer an even parallel grid for v7x
        TB2 = ((pl.cdiv(B, gb + 1) + 7) // 8) * 8
        if 0 < TB2 <= TB:
            TB = TB2
            gb = pl.cdiv(B, TB)
    return TB, gb


def _vmem_limit_bytes():
    try:
        cap = int(getattr(pltpu.get_tpu_info(), "vmem_capacity_bytes", 0) or 0)
    except Exception:
        cap = 0
    if cap <= 0:
        cap = 64 * 1024 * 1024           # conservative default (v7x per-TC VMEM)
    return min((cap * 3) // 4, 112 * 1024 * 1024)


def cicr_forward(claims, claim_evidences, evidences, params, *, tb=512):
    B, F = claims.shape
    C = params["wc_b"].shape[0]
    f32, bf16 = jnp.float32, jnp.bfloat16

    TB, grid_b = _pick_batch_tile(B, tb)

    # ---- host-side parameter prep (once) ----
    # K = D_u @ W2^T + b2 is batch-invariant; no nonlinearity between W1 and K,
    # so fuse exactly: logits = claims @ (W1^T K^T) + (b1 K^T).
    K = jnp.dot(params["D_u"], params["w2"].T) + params["b2"]             # [C, 64]
    A = jnp.dot(params["w1"].T, K.T).astype(bf16)                         # [F, C]
    bA = jnp.dot(params["b1"], K.T).astype(f32)                           # [1, C]

    du_bf = params["D_u"].astype(bf16)                                    # [C, F]
    w3t = params["w3"].T.astype(bf16)                                     # [F, F]
    wc_at = params["wc_a"].T.astype(bf16); wc_bt = params["wc_b"].T.astype(bf16)
    we_at = params["we_a"].T.astype(bf16); we_bt = params["we_b"].T.astype(bf16)
    wf_at = params["wf_a"].T.astype(bf16); wf_bt = params["wf_b"].T.astype(bf16)

    weight_args = (
        du_bf, A, bA, w3t, params["b3"],
        wc_at, params["bc_a"], wc_bt, params["bc_b"],
        we_at, params["be_a"], we_bt, params["be_b"],
        wf_at, params["bf_a"], wf_bt, params["bf_b"],
    )

    # Activations streamed as bf16 (halves per-step HBM traffic and tile VMEM).
    # No jnp.pad copies: ragged last batch block is masked by Pallas; any garbage
    # lives only in rows >= B (softmax / matmuls are row-independent).
    acts = (claims.astype(bf16), claim_evidences.astype(bf16), evidences.astype(bf16))

    act_spec = pl.BlockSpec((TB, F), lambda i: (i, 0))
    out_spec = pl.BlockSpec((3, TB, C), lambda i: (0, i, 0))

    def resident(a):
        # Full-array block with a constant index -> never re-DMA'd, stays in VMEM.
        # TODO(synk): at large F on v7x, single-buffer these (pl.Buffered(1)) to
        # reclaim the second weight buffer's VMEM.
        return pl.BlockSpec(a.shape, lambda i: (0, 0))

    flops = 2 * B * (4 * F * F + 5 * F * C)
    bytes_accessed = (3 * B * F * 2 + 3 * B * C * 4
                      + sum(int(a.size) * a.dtype.itemsize for a in weight_args))

    out = pl.pallas_call(
        cicr_kernel,
        out_shape=jax.ShapeDtypeStruct((3, B, C), f32),
        grid_spec=pltpu.PrefetchScalarGridSpec(
            num_scalar_prefetch=0,
            grid=(grid_b,),
            in_specs=[act_spec, act_spec, act_spec] + [resident(a) for a in weight_args],
            out_specs=out_spec,
        ),
        compiler_params=pltpu.CompilerParams(
            dimension_semantics=("parallel",),          # shard batch tiles over TCs
            vmem_limit_bytes=_vmem_limit_bytes(),
        ),
        cost_estimate=pl.CostEstimate(
            flops=int(flops),
            transcendentals=int(B * C),
            bytes_accessed=int(bytes_accessed)),
    )(*acts, *weight_args)

    rc, re, rf = out[0], out[1], out[2]

    # Lane-sparse [B, C] elementwise epilogue kept in the JAX wrapper.
    c = params["constant"][0, 0]
    res_final = jnp.log(1e-8 + jax.nn.sigmoid(rc + re + rf))
    counterfactual_final = jnp.log(1e-8 + jax.nn.sigmoid(rc + c + c))
    tie = res_final - counterfactual_final
    return rc, re, res_final, counterfactual_final, tie


def cicr_reference(claims, claim_evidences, evidences, p):
    """Pure-JAX f32 reference mirroring the PyTorch forward."""
    def classifier(x, wa, ba, wb, bb):
        h = jnp.maximum(x @ wa.T + ba, 0.0)
        return jnp.maximum(h @ wb.T + bb, 0.0)

    L = claims @ p["w1"].T + p["b1"]
    K = p["D_u"] @ p["w2"].T + p["b2"]
    w = jax.nn.softmax(L @ K.T, axis=-1)
    e_du = w @ p["D_u"]
    claims_iv = (claims + e_du) @ p["w3"].T + p["b3"]
    rc = classifier(claims_iv, p["wc_a"], p["bc_a"], p["wc_b"], p["bc_b"])
    re = classifier(evidences, p["we_a"], p["be_a"], p["we_b"], p["be_b"])
    rf = classifier(claim_evidences, p["wf_a"], p["bf_a"], p["wf_b"], p["bf_b"])
    c = p["constant"][0, 0]
    res_final = jnp.log(1e-8 + jax.nn.sigmoid(rc + re + rf))
    cf = jnp.log(1e-8 + jax.nn.sigmoid(rc + c + c))
    return rc, re, res_final, cf, res_final - cf


def make_params(key, nfeat, nclass, hidden=64):
    ks = jax.random.split(key, 32)
    i = iter(range(32))

    def lin(kw, kb, out_f, in_f):
        scale = 1.0 / jnp.sqrt(in_f)
        w = jax.random.uniform(kw, (out_f, in_f), jnp.float32, -scale, scale)
        b = jax.random.uniform(kb, (1, out_f), jnp.float32, -scale, scale)
        return w, b

    p = {}
    p["D_u"] = jax.random.normal(ks[next(i)], (nclass, nfeat), jnp.float32)
    p["w1"], p["b1"] = lin(ks[next(i)], ks[next(i)], hidden, nfeat)
    p["w2"], p["b2"] = lin(ks[next(i)], ks[next(i)], hidden, nfeat)
    p["w3"], p["b3"] = lin(ks[next(i)], ks[next(i)], nfeat, nfeat)
    p["wc_a"], p["bc_a"] = lin(ks[next(i)], ks[next(i)], nfeat, nfeat)
    p["wc_b"], p["bc_b"] = lin(ks[next(i)], ks[next(i)], nclass, nfeat)
    p["we_a"], p["be_a"] = lin(ks[next(i)], ks[next(i)], nfeat, nfeat)
    p["we_b"], p["be_b"] = lin(ks[next(i)], ks[next(i)], nclass, nfeat)
    p["wf_a"], p["bf_a"] = lin(ks[next(i)], ks[next(i)], nfeat, nfeat)
    p["wf_b"], p["bf_b"] = lin(ks[next(i)], ks[next(i)], nclass, nfeat)
    p["constant"] = jnp.zeros((1, 1), jnp.float32)  # nn.Parameter(tensor(0.0))
    return p


if __name__ == "__main__":
    B, nfeat, nclass = 2, 32, 4
    key = jax.random.PRNGKey(0)
    k_emb, k_par = jax.random.split(key)
    ke = jax.random.split(k_emb, 3)

    # synthetic BERT pooled outputs for the three (claim / pair / evidence) passes
    claims = jax.random.normal(ke[0], (B, nfeat), jnp.float32)
    claim_evidences = jax.random.normal(ke[1], (B, nfeat), jnp.float32)
    evidences = jax.random.normal(ke[2], (B, nfeat), jnp.float32)

    params = make_params(k_par, nfeat, nclass)

    outs = cicr_forward(claims, claim_evidences, evidences, params)
    outs = jax.block_until_ready(outs)

    refs = cicr_reference(claims, claim_evidences, evidences, params)
    names = ("res_claim", "res_evidence", "res_final", "counterfactual_final", "TIE")
    for name, got, want in zip(names, outs, refs):
        assert got.shape == (B, nclass), (name, got.shape)
        assert bool(jnp.all(jnp.isfinite(got))), name
        # bf16 matmuls + approx reciprocal -> loose tolerance vs. f32 reference
        assert bool(jnp.allclose(got, want, rtol=1e-1, atol=1e-1)), name

    print("KERNEL_OK")
</pallas_src>

<mosaic_0001>
module attributes {stable_mosaic.version = 11 : i64} {
  func.func @cicr_kernel(%arg0: i32, %arg1: memref<2x32xbf16, #tpu.memory_space<vmem>>, %arg2: memref<2x32xbf16, #tpu.memory_space<vmem>>, %arg3: memref<2x32xbf16, #tpu.memory_space<vmem>>, %arg4: memref<4x32xbf16, #tpu.memory_space<vmem>>, %arg5: memref<32x4xbf16, #tpu.memory_space<vmem>>, %arg6: memref<1x4xf32, #tpu.memory_space<vmem>>, %arg7: memref<32x32xbf16, #tpu.memory_space<vmem>>, %arg8: memref<1x32xf32, #tpu.memory_space<vmem>>, %arg9: memref<32x32xbf16, #tpu.memory_space<vmem>>, %arg10: memref<1x32xf32, #tpu.memory_space<vmem>>, %arg11: memref<32x4xbf16, #tpu.memory_space<vmem>>, %arg12: memref<1x4xf32, #tpu.memory_space<vmem>>, %arg13: memref<32x32xbf16, #tpu.memory_space<vmem>>, %arg14: memref<1x32xf32, #tpu.memory_space<vmem>>, %arg15: memref<32x4xbf16, #tpu.memory_space<vmem>>, %arg16: memref<1x4xf32, #tpu.memory_space<vmem>>, %arg17: memref<32x32xbf16, #tpu.memory_space<vmem>>, %arg18: memref<1x32xf32, #tpu.memory_space<vmem>>, %arg19: memref<32x4xbf16, #tpu.memory_space<vmem>>, %arg20: memref<1x4xf32, #tpu.memory_space<vmem>>, %arg21: memref<3x2x4xf32, #tpu.memory_space<vmem>>) attributes {dimension_semantics = [#tpu.dimension_semantics<parallel>], iteration_bounds = array<i64: 1>, scalar_prefetch = 0 : i64, scratch_operands = 0 : i64, tpu.core_type = #tpu.core_type<tc>, window_params = [{transform_indices = @transform_0, window_bounds = array<i64: 2, 32>}, {transform_indices = @transform_1, window_bounds = array<i64: 2, 32>}, {transform_indices = @transform_2, window_bounds = array<i64: 2, 32>}, {pipeline_mode = #tpu.pipeline_mode<synchronous>, transform_indices = @transform_3, window_bounds = array<i64: 4, 32>}, {pipeline_mode = #tpu.pipeline_mode<synchronous>, transform_indices = @transform_4, window_bounds = array<i64: 32, 4>}, {pipeline_mode = #tpu.pipeline_mode<synchronous>, transform_indices = @transform_5, window_bounds = array<i64: 1, 4>}, {pipeline_mode = #tpu.pipeline_mode<synchronous>, transform_indices = @transform_6, window_bounds = array<i64: 32, 32>}, {pipeline_mode = #tpu.pipeline_mode<synchronous>, transform_indices = @transform_7, window_bounds = array<i64: 1, 32>}, {pipeline_mode = #tpu.pipeline_mode<synchronous>, transform_indices = @transform_8, window_bounds = array<i64: 32, 32>}, {pipeline_mode = #tpu.pipeline_mode<synchronous>, transform_indices = @transform_9, window_bounds = array<i64: 1, 32>}, {pipeline_mode = #tpu.pipeline_mode<synchronous>, transform_indices = @transform_10, window_bounds = array<i64: 32, 4>}, {pipeline_mode = #tpu.pipeline_mode<synchronous>, transform_indices = @transform_11, window_bounds = array<i64: 1, 4>}, {pipeline_mode = #tpu.pipeline_mode<synchronous>, transform_indices = @transform_12, window_bounds = array<i64: 32, 32>}, {pipeline_mode = #tpu.pipeline_mode<synchronous>, transform_indices = @transform_13, window_bounds = array<i64: 1, 32>}, {pipeline_mode = #tpu.pipeline_mode<synchronous>, transform_indices = @transform_14, window_bounds = array<i64: 32, 4>}, {pipeline_mode = #tpu.pipeline_mode<synchronous>, transform_indices = @transform_15, window_bounds = array<i64: 1, 4>}, {pipeline_mode = #tpu.pipeline_mode<synchronous>, transform_indices = @transform_16, window_bounds = array<i64: 32, 32>}, {pipeline_mode = #tpu.pipeline_mode<synchronous>, transform_indices = @transform_17, window_bounds = array<i64: 1, 32>}, {pipeline_mode = #tpu.pipeline_mode<synchronous>, transform_indices = @transform_18, window_bounds = array<i64: 32, 4>}, {pipeline_mode = #tpu.pipeline_mode<synchronous>, transform_indices = @transform_19, window_bounds = array<i64: 1, 4>}, {transform_indices = @transform_20, window_bounds = array<i64: 3, 2, 4>}]} {
    %c0 = arith.constant 0 : index
    %c0_0 = arith.constant 0 : index
    %0 = vector.load %arg1[%c0, %c0_0] : memref<2x32xbf16, #tpu.memory_space<vmem>>, vector<2x32xbf16>
    %c0_1 = arith.constant 0 : index
    %c0_2 = arith.constant 0 : index
    %1 = vector.load %arg5[%c0_1, %c0_2] : memref<32x4xbf16, #tpu.memory_space<vmem>>, vector<32x4xbf16>
    %cst = arith.constant dense<0.000000e+00> : vector<2x4xf32>
    %2 = tpu.matmul %0, %1, %cst {dimension_numbers = #tpu.dot_dimension_numbers<[1], [0], [0], [1], [0, 0, 1, 1], [], []>} : vector<2x32xbf16>, vector<32x4xbf16>, vector<2x4xf32> -> vector<2x4xf32>
    %c0_3 = arith.constant 0 : index
    %c0_4 = arith.constant 0 : index
    %3 = vector.load %arg6[%c0_3, %c0_4] : memref<1x4xf32, #tpu.memory_space<vmem>>, vector<1x4xf32>
    %4 = vector.broadcast %3 : vector<1x4xf32> to vector<2x4xf32>
    %5 = arith.addf %2, %4 : vector<2x4xf32>
    %cst_5 = arith.constant dense<0xFF800000> : vector<2xf32>
    %6 = vector.multi_reduction <maximumf>, %5, %cst_5 [1] : vector<2x4xf32> to vector<2xf32>
    %7 = vector.shape_cast %6 : vector<2xf32> to vector<2x1xf32>
    %8 = vector.broadcast %7 : vector<2x1xf32> to vector<2x4xf32>
    %9 = arith.subf %5, %8 : vector<2x4xf32>
    %10 = math.exp %9 : vector<2x4xf32>
    %cst_6 = arith.constant dense<0.000000e+00> : vector<2xf32>
    %11 = vector.multi_reduction <add>, %10, %cst_6 [1] : vector<2x4xf32> to vector<2xf32>
    %12 = vector.shape_cast %11 : vector<2xf32> to vector<2x1xf32>
    %13 = tpu.reciprocal %12 {approx = true} : vector<2x1xf32> -> vector<2x1xf32>
    %14 = vector.broadcast %13 : vector<2x1xf32> to vector<2x4xf32>
    %15 = arith.mulf %10, %14 : vector<2x4xf32>
    %16 = arith.truncf %15 : vector<2x4xf32> to vector<2x4xbf16>
    %c0_7 = arith.constant 0 : index
    %c0_8 = arith.constant 0 : index
    %17 = vector.load %arg4[%c0_7, %c0_8] : memref<4x32xbf16, #tpu.memory_space<vmem>>, vector<4x32xbf16>
    %cst_9 = arith.constant dense<0.000000e+00> : vector<2x32xf32>
    %18 = tpu.matmul %16, %17, %cst_9 {dimension_numbers = #tpu.dot_dimension_numbers<[1], [0], [0], [1], [0, 0, 1, 1], [], []>} : vector<2x4xbf16>, vector<4x32xbf16>, vector<2x32xf32> -> vector<2x32xf32>
    %19 = arith.extf %0 : vector<2x32xbf16> to vector<2x32xf32>
    %20 = arith.addf %19, %18 : vector<2x32xf32>
    %21 = arith.truncf %20 : vector<2x32xf32> to vector<2x32xbf16>
    %c0_10 = arith.constant 0 : index
    %c0_11 = arith.constant 0 : index
    %22 = vector.load %arg7[%c0_10, %c0_11] : memref<32x32xbf16, #tpu.memory_space<vmem>>, vector<32x32xbf16>
    %cst_12 = arith.constant dense<0.000000e+00> : vector<2x32xf32>
    %23 = tpu.matmul %21, %22, %cst_12 {dimension_numbers = #tpu.dot_dimension_numbers<[1], [0], [0], [1], [0, 0, 1, 1], [], []>} : vector<2x32xbf16>, vector<32x32xbf16>, vector<2x32xf32> -> vector<2x32xf32>
    %c0_13 = arith.constant 0 : index
    %c0_14 = arith.constant 0 : index
    %24 = vector.load %arg8[%c0_13, %c0_14] : memref<1x32xf32, #tpu.memory_space<vmem>>, vector<1x32xf32>
    %25 = vector.broadcast %24 : vector<1x32xf32> to vector<2x32xf32>
    %26 = arith.addf %23, %25 : vector<2x32xf32>
    %27 = arith.truncf %26 : vector<2x32xf32> to vector<2x32xbf16>
    %c0_15 = arith.constant 0 : index
    %c0_16 = arith.constant 0 : index
    %28 = vector.load %arg9[%c0_15, %c0_16] : memref<32x32xbf16, #tpu.memory_space<vmem>>, vector<32x32xbf16>
    %cst_17 = arith.constant dense<0.000000e+00> : vector<2x32xf32>
    %29 = tpu.matmul %27, %28, %cst_17 {dimension_numbers = #tpu.dot_dimension_numbers<[1], [0], [0], [1], [0, 0, 1, 1], [], []>} : vector<2x32xbf16>, vector<32x32xbf16>, vector<2x32xf32> -> vector<2x32xf32>
    %c0_18 = arith.constant 0 : index
    %c0_19 = arith.constant 0 : index
    %30 = vector.load %arg10[%c0_18, %c0_19] : memref<1x32xf32, #tpu.memory_space<vmem>>, vector<1x32xf32>
    %31 = vector.broadcast %30 : vector<1x32xf32> to vector<2x32xf32>
    %32 = arith.addf %29, %31 : vector<2x32xf32>
    %cst_20 = arith.constant 0.000000e+00 : f32
    %33 = vector.broadcast %cst_20 : f32 to vector<2x32xf32>
    %34 = arith.maximumf %32, %33 : vector<2x32xf32>
    %35 = arith.truncf %34 : vector<2x32xf32> to vector<2x32xbf16>
    %c0_21 = arith.constant 0 : index
    %c0_22 = arith.constant 0 : index
    %36 = vector.load %arg11[%c0_21, %c0_22] : memref<32x4xbf16, #tpu.memory_space<vmem>>, vector<32x4xbf16>
    %cst_23 = arith.constant dense<0.000000e+00> : vector<2x4xf32>
    %37 = tpu.matmul %35, %36, %cst_23 {dimension_numbers = #tpu.dot_dimension_numbers<[1], [0], [0], [1], [0, 0, 1, 1], [], []>} : vector<2x32xbf16>, vector<32x4xbf16>, vector<2x4xf32> -> vector<2x4xf32>
    %c0_24 = arith.constant 0 : index
    %c0_25 = arith.constant 0 : index
    %38 = vector.load %arg12[%c0_24, %c0_25] : memref<1x4xf32, #tpu.memory_space<vmem>>, vector<1x4xf32>
    %39 = vector.broadcast %38 : vector<1x4xf32> to vector<2x4xf32>
    %40 = arith.addf %37, %39 : vector<2x4xf32>
    %cst_26 = arith.constant 0.000000e+00 : f32
    %41 = vector.broadcast %cst_26 : f32 to vector<2x4xf32>
    %42 = arith.maximumf %40, %41 : vector<2x4xf32>
    %c0_27 = arith.constant 0 : index
    %c0_28 = arith.constant 0 : index
    %c0_29 = arith.constant 0 : index
    %43 = vector.load %arg21[%c0_27, %c0_28, %c0_29] : memref<3x2x4xf32, #tpu.memory_space<vmem>>, vector<1x2x4xf32>
    %44 = vector.shape_cast %43 : vector<1x2x4xf32> to vector<2x4xf32>
    %45 = vector.shape_cast %42 : vector<2x4xf32> to vector<1x2x4xf32>
    tpu.vector_store %arg21[%c0_27, %c0_28, %c0_29], %45 {strides = array<i32>} : memref<3x2x4xf32, #tpu.memory_space<vmem>>, vector<1x2x4xf32>,
    %c0_30 = arith.constant 0 : index
    %c0_31 = arith.constant 0 : index
    %46 = vector.load %arg3[%c0_30, %c0_31] : memref<2x32xbf16, #tpu.memory_space<vmem>>, vector<2x32xbf16>
    %c0_32 = arith.constant 0 : index
    %c0_33 = arith.constant 0 : index
    %47 = vector.load %arg13[%c0_32, %c0_33] : memref<32x32xbf16, #tpu.memory_space<vmem>>, vector<32x32xbf16>
    %cst_34 = arith.constant dense<0.000000e+00> : vector<2x32xf32>
    %48 = tpu.matmul %46, %47, %cst_34 {dimension_numbers = #tpu.dot_dimension_numbers<[1], [0], [0], [1], [0, 0, 1, 1], [], []>} : vector<2x32xbf16>, vector<32x32xbf16>, vector<2x32xf32> -> vector<2x32xf32>
    %c0_35 = arith.constant 0 : index
    %c0_36 = arith.constant 0 : index
    %49 = vector.load %arg14[%c0_35, %c0_36] : memref<1x32xf32, #tpu.memory_space<vmem>>, vector<1x32xf32>
    %50 = vector.broadcast %49 : vector<1x32xf32> to vector<2x32xf32>
    %51 = arith.addf %48, %50 : vector<2x32xf32>
    %cst_37 = arith.constant 0.000000e+00 : f32
    %52 = vector.broadcast %cst_37 : f32 to vector<2x32xf32>
    %53 = arith.maximumf %51, %52 : vector<2x32xf32>
    %54 = arith.truncf %53 : vector<2x32xf32> to vector<2x32xbf16>
    %c0_38 = arith.constant 0 : index
    %c0_39 = arith.constant 0 : index
    %55 = vector.load %arg15[%c0_38, %c0_39] : memref<32x4xbf16, #tpu.memory_space<vmem>>, vector<32x4xbf16>
    %cst_40 = arith.constant dense<0.000000e+00> : vector<2x4xf32>
    %56 = tpu.matmul %54, %55, %cst_40 {dimension_numbers = #tpu.dot_dimension_numbers<[1], [0], [0], [1], [0, 0, 1, 1], [], []>} : vector<2x32xbf16>, vector<32x4xbf16>, vector<2x4xf32> -> vector<2x4xf32>
    %c0_41 = arith.constant 0 : index
    %c0_42 = arith.constant 0 : index
    %57 = vector.load %arg16[%c0_41, %c0_42] : memref<1x4xf32, #tpu.memory_space<vmem>>, vector<1x4xf32>
    %58 = vector.broadcast %57 : vector<1x4xf32> to vector<2x4xf32>
    %59 = arith.addf %56, %58 : vector<2x4xf32>
    %cst_43 = arith.constant 0.000000e+00 : f32
    %60 = vector.broadcast %cst_43 : f32 to vector<2x4xf32>
    %61 = arith.maximumf %59, %60 : vector<2x4xf32>
    %c1 = arith.constant 1 : index
    %c0_44 = arith.constant 0 : index
    %c0_45 = arith.constant 0 : index
    %62 = vector.load %arg21[%c1, %c0_44, %c0_45] : memref<3x2x4xf32, #tpu.memory_space<vmem>>, vector<1x2x4xf32>
    %63 = vector.shape_cast %62 : vector<1x2x4xf32> to vector<2x4xf32>
    %64 = vector.shape_cast %61 : vector<2x4xf32> to vector<1x2x4xf32>
    tpu.vector_store %arg21[%c1, %c0_44, %c0_45], %64 {strides = array<i32>} : memref<3x2x4xf32, #tpu.memory_space<vmem>>, vector<1x2x4xf32>,
    %c0_46 = arith.constant 0 : index
    %c0_47 = arith.constant 0 : index
    %65 = vector.load %arg2[%c0_46, %c0_47] : memref<2x32xbf16, #tpu.memory_space<vmem>>, vector<2x32xbf16>
    %c0_48 = arith.constant 0 : index
    %c0_49 = arith.constant 0 : index
    %66 = vector.load %arg17[%c0_48, %c0_49] : memref<32x32xbf16, #tpu.memory_space<vmem>>, vector<32x32xbf16>
    %cst_50 = arith.constant dense<0.000000e+00> : vector<2x32xf32>
    %67 = tpu.matmul %65, %66, %cst_50 {dimension_numbers = #tpu.dot_dimension_numbers<[1], [0], [0], [1], [0, 0, 1, 1], [], []>} : vector<2x32xbf16>, vector<32x32xbf16>, vector<2x32xf32> -> vector<2x32xf32>
    %c0_51 = arith.constant 0 : index
    %c0_52 = arith.constant 0 : index
    %68 = vector.load %arg18[%c0_51, %c0_52] : memref<1x32xf32, #tpu.memory_space<vmem>>, vector<1x32xf32>
    %69 = vector.broadcast %68 : vector<1x32xf32> to vector<2x32xf32>
    %70 = arith.addf %67, %69 : vector<2x32xf32>
    %cst_53 = arith.constant 0.000000e+00 : f32
    %71 = vector.broadcast %cst_53 : f32 to vector<2x32xf32>
    %72 = arith.maximumf %70, %71 : vector<2x32xf32>
    %73 = arith.truncf %72 : vector<2x32xf32> to vector<2x32xbf16>
    %c0_54 = arith.constant 0 : index
    %c0_55 = arith.constant 0 : index
    %74 = vector.load %arg19[%c0_54, %c0_55] : memref<32x4xbf16, #tpu.memory_space<vmem>>, vector<32x4xbf16>
    %cst_56 = arith.constant dense<0.000000e+00> : vector<2x4xf32>
    %75 = tpu.matmul %73, %74, %cst_56 {dimension_numbers = #tpu.dot_dimension_numbers<[1], [0], [0], [1], [0, 0, 1, 1], [], []>} : vector<2x32xbf16>, vector<32x4xbf16>, vector<2x4xf32> -> vector<2x4xf32>
    %c0_57 = arith.constant 0 : index
    %c0_58 = arith.constant 0 : index
    %76 = vector.load %arg20[%c0_57, %c0_58] : memref<1x4xf32, #tpu.memory_space<vmem>>, vector<1x4xf32>
    %77 = vector.broadcast %76 : vector<1x4xf32> to vector<2x4xf32>
    %78 = arith.addf %75, %77 : vector<2x4xf32>
    %cst_59 = arith.constant 0.000000e+00 : f32
    %79 = vector.broadcast %cst_59 : f32 to vector<2x4xf32>
    %80 = arith.maximumf %78, %79 : vector<2x4xf32>
    %c2 = arith.constant 2 : index
    %c0_60 = arith.constant 0 : index
    %c0_61 = arith.constant 0 : index
    %81 = vector.load %arg21[%c2, %c0_60, %c0_61] : memref<3x2x4xf32, #tpu.memory_space<vmem>>, vector<1x2x4xf32>
    %82 = vector.shape_cast %81 : vector<1x2x4xf32> to vector<2x4xf32>
    %83 = vector.shape_cast %80 : vector<2x4xf32> to vector<1x2x4xf32>
    tpu.vector_store %arg21[%c2, %c0_60, %c0_61], %83 {strides = array<i32>} : memref<3x2x4xf32, #tpu.memory_space<vmem>>, vector<1x2x4xf32>,
    return
  }
  func.func @transform_0(%arg0: i32) -> (i32, i32) {
    %c0_i32 = arith.constant 0 : i32
    %c0_i32_0 = arith.constant 0 : i32
    return %arg0, %c0_i32 : i32, i32
  }
  func.func @transform_1(%arg0: i32) -> (i32, i32) {
    %c0_i32 = arith.constant 0 : i32
    %c0_i32_0 = arith.constant 0 : i32
    return %arg0, %c0_i32 : i32, i32
  }
  func.func @transform_2(%arg0: i32) -> (i32, i32) {
    %c0_i32 = arith.constant 0 : i32
    %c0_i32_0 = arith.constant 0 : i32
    return %arg0, %c0_i32 : i32, i32
  }
  func.func @transform_3(%arg0: i32) -> (i32, i32) {
    %c0_i32 = arith.constant 0 : i32
    %c0_i32_0 = arith.constant 0 : i32
    %c0_i32_1 = arith.constant 0 : i32
    return %c0_i32, %c0_i32_0 : i32, i32
  }
  func.func @transform_4(%arg0: i32) -> (i32, i32) {
    %c0_i32 = arith.constant 0 : i32
    %c0_i32_0 = arith.constant 0 : i32
    %c0_i32_1 = arith.constant 0 : i32
    return %c0_i32, %c0_i32_0 : i32, i32
  }
  func.func @transform_5(%arg0: i32) -> (i32, i32) {
    %c0_i32 = arith.constant 0 : i32
    %c0_i32_0 = arith.constant 0 : i32
    %c0_i32_1 = arith.constant 0 : i32
    return %c0_i32, %c0_i32_0 : i32, i32
  }
  func.func @transform_6(%arg0: i32) -> (i32, i32) {
    %c0_i32 = arith.constant 0 : i32
    %c0_i32_0 = arith.constant 0 : i32
    %c0_i32_1 = arith.constant 0 : i32
    return %c0_i32, %c0_i32_0 : i32, i32
  }
  func.func @transform_7(%arg0: i32) -> (i32, i32) {
    %c0_i32 = arith.constant 0 : i32
    %c0_i32_0 = arith.constant 0 : i32
    %c0_i32_1 = arith.constant 0 : i32
    return %c0_i32, %c0_i32_0 : i32, i32
  }
  func.func @transform_8(%arg0: i32) -> (i32, i32) {
    %c0_i32 = arith.constant 0 : i32
    %c0_i32_0 = arith.constant 0 : i32
    %c0_i32_1 = arith.constant 0 : i32
    return %c0_i32, %c0_i32_0 : i32, i32
  }
  func.func @transform_9(%arg0: i32) -> (i32, i32) {
    %c0_i32 = arith.constant 0 : i32
    %c0_i32_0 = arith.constant 0 : i32
    %c0_i32_1 = arith.constant 0 : i32
    return %c0_i32, %c0_i32_0 : i32, i32
  }
  func.func @transform_10(%arg0: i32) -> (i32, i32) {
    %c0_i32 = arith.constant 0 : i32
    %c0_i32_0 = arith.constant 0 : i32
    %c0_i32_1 = arith.constant 0 : i32
    return %c0_i32, %c0_i32_0 : i32, i32
  }
  func.func @transform_11(%arg0: i32) -> (i32, i32) {
    %c0_i32 = arith.constant 0 : i32
    %c0_i32_0 = arith.constant 0 : i32
    %c0_i32_1 = arith.constant 0 : i32
    return %c0_i32, %c0_i32_0 : i32, i32
  }
  func.func @transform_12(%arg0: i32) -> (i32, i32) {
    %c0_i32 = arith.constant 0 : i32
    %c0_i32_0 = arith.constant 0 : i32
    %c0_i32_1 = arith.constant 0 : i32
    return %c0_i32, %c0_i32_0 : i32, i32
  }
  func.func @transform_13(%arg0: i32) -> (i32, i32) {
    %c0_i32 = arith.constant 0 : i32
    %c0_i32_0 = arith.constant 0 : i32
    %c0_i32_1 = arith.constant 0 : i32
    return %c0_i32, %c0_i32_0 : i32, i32
  }
  func.func @transform_14(%arg0: i32) -> (i32, i32) {
    %c0_i32 = arith.constant 0 : i32
    %c0_i32_0 = arith.constant 0 : i32
    %c0_i32_1 = arith.constant 0 : i32
    return %c0_i32, %c0_i32_0 : i32, i32
  }
  func.func @transform_15(%arg0: i32) -> (i32, i32) {
    %c0_i32 = arith.constant 0 : i32
    %c0_i32_0 = arith.constant 0 : i32
    %c0_i32_1 = arith.constant 0 : i32
    return %c0_i32, %c0_i32_0 : i32, i32
  }
  func.func @transform_16(%arg0: i32) -> (i32, i32) {
    %c0_i32 = arith.constant 0 : i32
    %c0_i32_0 = arith.constant 0 : i32
    %c0_i32_1 = arith.constant 0 : i32
    return %c0_i32, %c0_i32_0 : i32, i32
  }
  func.func @transform_17(%arg0: i32) -> (i32, i32) {
    %c0_i32 = arith.constant 0 : i32
    %c0_i32_0 = arith.constant 0 : i32
    %c0_i32_1 = arith.constant 0 : i32
    return %c0_i32, %c0_i32_0 : i32, i32
  }
  func.func @transform_18(%arg0: i32) -> (i32, i32) {
    %c0_i32 = arith.constant 0 : i32
    %c0_i32_0 = arith.constant 0 : i32
    %c0_i32_1 = arith.constant 0 : i32
    return %c0_i32, %c0_i32_0 : i32, i32
  }
  func.func @transform_19(%arg0: i32) -> (i32, i32) {
    %c0_i32 = arith.constant 0 : i32
    %c0_i32_0 = arith.constant 0 : i32
    %c0_i32_1 = arith.constant 0 : i32
    return %c0_i32, %c0_i32_0 : i32, i32
  }
  func.func @transform_20(%arg0: i32) -> (i32, i32, i32) {
    %c0_i32 = arith.constant 0 : i32
    %c0_i32_0 = arith.constant 0 : i32
    %c0_i32_1 = arith.constant 0 : i32
    return %c0_i32, %arg0, %c0_i32_0 : i32, i32, i32
  }
}

</mosaic_0001>

<llo_original>
// kernel: tpu_custom_call.1
$region0: #{tpu_custom_call.1}
  #allocation0 [shape = 'u32[]', space=smem, size = 0x4, offset = 0x4, fixed_abs, tag = 'smem constant byte address 0x4 - core index']
  #allocation1 [shape = 'u32[144,128]{1,0:T(1,128)}', space=vmem, size = 0x12000, scoped, tag = 'internal scratch']
  %s0 = inlined_call_operand.hbm [shape: bf16[2,32], index: 0, kind: input, shape index: {}]
  %s1 = inlined_call_operand.vmem [shape: bf16[2,32], index: 1, kind: input, shape index: {}]
  %s2 = inlined_call_operand.hbm [shape: bf16[2,32], index: 2, kind: input, shape index: {}]
  %s3 = inlined_call_operand.vmem [shape: bf16[4,32], index: 3, kind: input, shape index: {}]
  %s4 = inlined_call_operand.vmem [shape: bf16[32,4], index: 4, kind: input, shape index: {}]
  %s5 = inlined_call_operand.vmem [shape: f32[1,4], index: 5, kind: input, shape index: {}]
  %s6 = inlined_call_operand.vmem [shape: bf16[32,32], index: 6, kind: input, shape index: {}]
  %s7 = inlined_call_operand.vmem [shape: f32[1,32], index: 7, kind: input, shape index: {}]
  %s8 = inlined_call_operand.vmem [shape: bf16[32,32], index: 8, kind: input, shape index: {}]
  %s9 = inlined_call_operand.vmem [shape: f32[1,32], index: 9, kind: input, shape index: {}]
  %s10 = inlined_call_operand.vmem [shape: bf16[32,4], index: 10, kind: input, shape index: {}]
  %s11 = inlined_call_operand.vmem [shape: f32[1,4], index: 11, kind: input, shape index: {}]
  %s12 = inlined_call_operand.vmem [shape: bf16[32,32], index: 12, kind: input, shape index: {}]
  %s13 = inlined_call_operand.vmem [shape: f32[1,32], index: 13, kind: input, shape index: {}]
  %s14 = inlined_call_operand.vmem [shape: bf16[32,4], index: 14, kind: input, shape index: {}]
  %s15 = inlined_call_operand.vmem [shape: f32[1,4], index: 15, kind: input, shape index: {}]
  %s16 = inlined_call_operand.vmem [shape: bf16[32,32], index: 16, kind: input, shape index: {}]
  %s17 = inlined_call_operand.vmem [shape: f32[1,32], index: 17, kind: input, shape index: {}]
  %s18 = inlined_call_operand.vmem [shape: bf16[32,4], index: 18, kind: input, shape index: {}]
  %s19 = inlined_call_operand.vmem [shape: f32[1,4], index: 19, kind: input, shape index: {}]
  %s20 = inlined_call_operand.hbm [shape: f32[3,2,4], index: 20, kind: output, shape index: {}]
  %s21 = sld [smem:[#allocation0]]
  $region98: #{tpu_custom_call.1} parent=0
    _
  %s23 = ssub.s32 1, %s21
  %s24 = scalar_select 0, %s23, %s21
  $region1: #{tpu_custom_call.1} parent=0
    #allocation2 [shape = 'u8[512]{0}', space=vmem, size = 0x400, scoped, tag = 'input window, operand 0, single buffered']
    #allocation3 [shape = 's32[1]{0}', space=sflag, size = 0x4, scoped, tag = 'scoped memory for tpu_custom_call.1']
    #allocation4 [shape = 's32[1]{0}', space=sflag, size = 0x4, scoped, tag = 'scoped memory for tpu_custom_call.1']
    #allocation5 [shape = 'u8[512]{0}', space=vmem, size = 0x400, scoped, tag = 'input window, operand 2, single buffered']
    #allocation6 [shape = 's32[1]{0}', space=sflag, size = 0x4, scoped, tag = 'scoped memory for tpu_custom_call.1']
    #allocation7 [shape = 'u8[3072]{0}', space=vmem, size = 0xc00, scoped, tag = 'output window, operand 0, single buffered']
    %25 = vsyncpa [#allocation3], 0
    %26 = vsyncpa [#allocation6], 0
    %27 = vsyncpa [#allocation4], 0
    // Predicated region
    $region2: #{tpu_custom_call.1} parent=1 // pred_check
      _
    $region3: #{tpu_custom_call.1} parent=1 // pred_check_branch
      %29 = sbr.rel (0) target = $region5
    $region4: #{tpu_custom_call.1} parent=1 // pred_region
      %s31 = ssub.s32 16, 16
      %32 = vsyncadd [#allocation3], %s31
      %s34 = sshll.u32 [#allocation2], 4
      %s35 = int_to_ptr.vmem [resolvable:$true] %s34
      %37 = dma.hbm_to_vmem [thread:$0]  %s0, 16, %s35, [#allocation3]
    $region5: #{tpu_custom_call.1} parent=1 // pred_fallthru
      _
    // Predicated region
    $region6: #{tpu_custom_call.1} parent=1 // pred_check
      _
    $region7: #{tpu_custom_call.1} parent=1 // pred_check_branch
      %39 = sbr.rel (0) target = $region9
    $region8: #{tpu_custom_call.1} parent=1 // pred_region
      _
    $region9: #{tpu_custom_call.1} parent=1 // pred_fallthru
      _
    // Predicated region
    $region10: #{tpu_custom_call.1} parent=1 // pred_check
      _
    $region11: #{tpu_custom_call.1} parent=1 // pred_check_branch
      %41 = sbr.rel (0) target = $region13
    $region12: #{tpu_custom_call.1} parent=1 // pred_region
      %s43 = ssub.s32 16, 16
      %44 = vsyncadd [#allocation6], %s43
      %s46 = sshll.u32 [#allocation5], 4
      %s47 = int_to_ptr.vmem [resolvable:$true] %s46
      %49 = dma.hbm_to_vmem [thread:$0]  %s2, 16, %s47, [#allocation6]
    $region13: #{tpu_custom_call.1} parent=1 // pred_fallthru
      _
    // Predicated region
    $region14: #{tpu_custom_call.1} parent=1 // pred_check
      _
    $region15: #{tpu_custom_call.1} parent=1 // pred_check_branch
      %51 = sbr.rel (0) target = $region17
    $region16: #{tpu_custom_call.1} parent=1 // pred_region
      _
    $region17: #{tpu_custom_call.1} parent=1 // pred_fallthru
      _
    // Predicated region
    $region18: #{tpu_custom_call.1} parent=1 // pred_check
      _
    $region19: #{tpu_custom_call.1} parent=1 // pred_check_branch
      %53 = sbr.rel (0) target = $region21
    $region20: #{tpu_custom_call.1} parent=1 // pred_region
      _
    $region21: #{tpu_custom_call.1} parent=1 // pred_fallthru
      _
    // Predicated region
    $region22: #{tpu_custom_call.1} parent=1 // pred_check
      _
    $region23: #{tpu_custom_call.1} parent=1 // pred_check_branch
      %55 = sbr.rel (0) target = $region25
    $region24: #{tpu_custom_call.1} parent=1 // pred_region
      _
    $region25: #{tpu_custom_call.1} parent=1 // pred_fallthru
      _
    // Predicated region
    $region26: #{tpu_custom_call.1} parent=1 // pred_check
      _
    $region27: #{tpu_custom_call.1} parent=1 // pred_check_branch
      %57 = sbr.rel (0) target = $region29
    $region28: #{tpu_custom_call.1} parent=1 // pred_region
      _
    $region29: #{tpu_custom_call.1} parent=1 // pred_fallthru
      _
    // Predicated region
    $region30: #{tpu_custom_call.1} parent=1 // pred_check
      _
    $region31: #{tpu_custom_call.1} parent=1 // pred_check_branch
      %59 = sbr.rel (0) target = $region33
    $region32: #{tpu_custom_call.1} parent=1 // pred_region
      _
    $region33: #{tpu_custom_call.1} parent=1 // pred_fallthru
      _
    // Predicated region
    $region34: #{tpu_custom_call.1} parent=1 // pred_check
      _
    $region35: #{tpu_custom_call.1} parent=1 // pred_check_branch
      %61 = sbr.rel (0) target = $region37
    $region36: #{tpu_custom_call.1} parent=1 // pred_region
      _
    $region37: #{tpu_custom_call.1} parent=1 // pred_fallthru
      _
    // Predicated region
    $region38: #{tpu_custom_call.1} parent=1 // pred_check
      _
    $region39: #{tpu_custom_call.1} parent=1 // pred_check_branch
      %63 = sbr.rel (0) target = $region41
    $region40: #{tpu_custom_call.1} parent=1 // pred_region
      _
    $region41: #{tpu_custom_call.1} parent=1 // pred_fallthru
      _
    // Predicated region
    $region42: #{tpu_custom_call.1} parent=1 // pred_check
      _
    $region43: #{tpu_custom_call.1} parent=1 // pred_check_branch
      %65 = sbr.rel (0) target = $region45
    $region44: #{tpu_custom_call.1} parent=1 // pred_region
      _
    $region45: #{tpu_custom_call.1} parent=1 // pred_fallthru
      _
    // Predicated region
    $region46: #{tpu_custom_call.1} parent=1 // pred_check
      _
    $region47: #{tpu_custom_call.1} parent=1 // pred_check_branch
      %67 = sbr.rel (0) target = $region49
    $region48: #{tpu_custom_call.1} parent=1 // pred_region
      _
    $region49: #{tpu_custom_call.1} parent=1 // pred_fallthru
      _
    // Predicated region
    $region50: #{tpu_custom_call.1} parent=1 // pred_check
      _
    $region51: #{tpu_custom_call.1} parent=1 // pred_check_branch
      %69 = sbr.rel (0) target = $region53
    $region52: #{tpu_custom_call.1} parent=1 // pred_region
      _
    $region53: #{tpu_custom_call.1} parent=1 // pred_fallthru
      _
    // Predicated region
    $region54: #{tpu_custom_call.1} parent=1 // pred_check
      _
    $region55: #{tpu_custom_call.1} parent=1 // pred_check_branch
      %71 = sbr.rel (0) target = $region57
    $region56: #{tpu_custom_call.1} parent=1 // pred_region
      _
    $region57: #{tpu_custom_call.1} parent=1 // pred_fallthru
      _
    // Predicated region
    $region58: #{tpu_custom_call.1} parent=1 // pred_check
      _
    $region59: #{tpu_custom_call.1} parent=1 // pred_check_branch
      %73 = sbr.rel (0) target = $region61
    $region60: #{tpu_custom_call.1} parent=1 // pred_region
      _
    $region61: #{tpu_custom_call.1} parent=1 // pred_fallthru
      _
    // Predicated region
    $region62: #{tpu_custom_call.1} parent=1 // pred_check
      _
    $region63: #{tpu_custom_call.1} parent=1 // pred_check_branch
      %75 = sbr.rel (0) target = $region65
    $region64: #{tpu_custom_call.1} parent=1 // pred_region
      _
    $region65: #{tpu_custom_call.1} parent=1 // pred_fallthru
      _
    // Predicated region
    $region66: #{tpu_custom_call.1} parent=1 // pred_check
      _
    $region67: #{tpu_custom_call.1} parent=1 // pred_check_branch
      %77 = sbr.rel (0) target = $region69
    $region68: #{tpu_custom_call.1} parent=1 // pred_region
      _
    $region69: #{tpu_custom_call.1} parent=1 // pred_fallthru
      _
    // Predicated region
    $region70: #{tpu_custom_call.1} parent=1 // pred_check
      _
    $region71: #{tpu_custom_call.1} parent=1 // pred_check_branch
      %79 = sbr.rel (0) target = $region73
    $region72: #{tpu_custom_call.1} parent=1 // pred_region
      _
    $region73: #{tpu_custom_call.1} parent=1 // pred_fallthru
      _
    // Predicated region
    $region74: #{tpu_custom_call.1} parent=1 // pred_check
      _
    $region75: #{tpu_custom_call.1} parent=1 // pred_check_branch
      %81 = sbr.rel (0) target = $region77
    $region76: #{tpu_custom_call.1} parent=1 // pred_region
      _
    $region77: #{tpu_custom_call.1} parent=1 // pred_fallthru
      _
    // Predicated region
    $region78: #{tpu_custom_call.1} parent=1 // pred_check
      _
    $region79: #{tpu_custom_call.1} parent=1 // pred_check_branch
      %83 = sbr.rel (0) target = $region81
    $region80: #{tpu_custom_call.1} parent=1 // pred_region
      _
    $region81: #{tpu_custom_call.1} parent=1 // pred_fallthru
      _
    // Predicated region
    $region82: #{tpu_custom_call.1} parent=1 // pred_check
      _
    $region83: #{tpu_custom_call.1} parent=1 // pred_check_branch
      %85 = sbr.rel (0) target = $region85
    $region84: #{tpu_custom_call.1} parent=1 // pred_region
      %86 = dma.done [#allocation3], 16
    $region85: #{tpu_custom_call.1} parent=1 // pred_fallthru
      _
    // Predicated region
    $region86: #{tpu_custom_call.1} parent=1 // pred_check
      _
    $region87: #{tpu_custom_call.1} parent=1 // pred_check_branch
      %88 = sbr.rel (0) target = $region89
    $region88: #{tpu_custom_call.1} parent=1 // pred_region
      %89 = dma.done [#allocation6], 16
    $region89: #{tpu_custom_call.1} parent=1 // pred_fallthru
      _
    %v91 = vld [vmem:[#allocation2] sm:$0x1]
    %v92 = vld [vmem:[%s4] sm:$0xf]
    %v93 = vld [vmem:[%s4 + $0x4] sm:$0xf]
    %v94 = vld [vmem:[%s4 + $0x8] sm:$0xf]
    %v95 = vld [vmem:[%s4 + $0xc] sm:$0xf]
    %v96 = vld [vmem:[%s5] sm:$0x1]
    %v98 = vlaneseq
    %v99 = vshrl.u32 %v98, 7
    %v100 = vsub.s32 0, %v99
    %v101 = vrot.slane %v96, %v100
    %v107 = vunpack.c.l.b16 %v92
    %v108 = vunpack.c.l.b16 %v93
    %v109 = vunpack.c.l.b16 %v94
    %v110 = vunpack.c.l.b16 %v95
    %v111 = vpack.c.b16 %v108, %v107
    %v112 = vpack.c.b16 %v110, %v109
    %vm115 = vcmask 261120
    %v117 = vsel %vm115, %v91, 0
    %119 = vmatprep.subr.bf16.mxu0 0
    %120 = vmatpush1.bf16.msra.mxu0 0
    %121 = vmatprep.subr.bf16.mxu0 0
    %122 = vmatpush1.bf16.msra.mxu0 0
    %123 = vmatprep.subr.bf16.mxu0 0
    %124 = vmatpush1.bf16.msra.mxu0 0
    %125 = vmatprep.subr.bf16.mxu0 0
    %126 = vmatpush1.bf16.msra.mxu0 0
    %127 = vmatprep.subr.bf16.mxu0 0
    %128 = vmatpush1.bf16.msra.mxu0 0
    %129 = vmatprep.subr.bf16.mxu0 0
    %130 = vmatpush1.bf16.msra.mxu0 0
    %131 = vmatprep.subr.bf16.mxu0 0
    %132 = vmatpush1.bf16.msra.mxu0 %v112
    %133 = vmatprep.subr.bf16.mxu0 0
    %134 = vmatpush1.bf16.msra.mxu0 %v111
    %135 = vmatprep.subr.bf16.mxu0 0
    %136 = vmatpush2.bf16.msra.mxu0 0
    %137 = vmatprep.subr.bf16.mxu0 0
    %138 = vmatpush2.bf16.msra.mxu0 0
    %139 = vmatprep.subr.bf16.mxu0 0
    %140 = vmatpush2.bf16.msra.mxu0 0
    %141 = vmatprep.subr.bf16.mxu0 0
    %142 = vmatpush2.bf16.msra.mxu0 0
    %143 = vmatprep.subr.bf16.mxu0 0
    %144 = vmatpush2.bf16.msra.mxu0 0
    %145 = vmatprep.subr.bf16.mxu0 0
    %146 = vmatpush2.bf16.msra.mxu0 0
    %147 = vmatprep.subr.bf16.mxu0 0
    %148 = vmatpush2.bf16.msra.mxu0 0
    %149 = vmatprep.subr.bf16.mxu0 0
    %150 = vmatpush2.bf16.msra.mxu0 0
    %151 = vmatprep.mubr.bf16.mxu0 0
    %152 = vmatmul.mubr.bf16.gmra.mxu0 %v117
    %v153 = vpop.f32.mrf.mxu0
    %v154 = vadd.f32 %v101, %v153
    %v155 = vpop.f32.mrf.mxu0
    %v156 = vpop.f32.mrf.mxu0
    %v157 = vpop.f32.mrf.mxu0
    %158 = vdwg.mxu0
    %vm159 = vcmask 25600
    %v160 = vsel %vm159, %v154, -inf
    %161 = vmax.xlane.f32.xlu0 %v160
    %v162 = vpop.xlane.xlu0 %161
    %v163 = vsub.f32 %v154, %v162
    %v164 = vmul.f32 %v163, 1.442695
    %v165 = vpow.pop %v164
    %v166 = vsel %vm159, %v165, 0.0
    %167 = vadd.xlane.f32.xlu0 %v166
    %v168 = vpop.xlane.xlu0 %167
    %v169 = vrcp.pop %v168
    %v170 = vmul.f32 %v165, %v169
    %v171 = vpack.c.bf16 %v170, %v170
    %v172 = vld [vmem:[%s3] sm:$0x3]
    %vm173 = vcmask 31744
    %v175 = vsel %vm173, %v171, 0
    %vm177 = vcmask 1041408
    %v179 = vsel %vm177, %v172, 0
    %181 = vmatprep.subr.bf16.mxu0 0
    %182 = vmatpush1.bf16.msra.mxu0 0
    %183 = vmatprep.subr.bf16.mxu0 0
    %184 = vmatpush1.bf16.msra.mxu0 0
    %185 = vmatprep.subr.bf16.mxu0 0
    %186 = vmatpush1.bf16.msra.mxu0 0
    %187 = vmatprep.subr.bf16.mxu0 0
    %188 = vmatpush1.bf16.msra.mxu0 0
    %189 = vmatprep.subr.bf16.mxu0 0
    %190 = vmatpush1.bf16.msra.mxu0 0
    %191 = vmatprep.subr.bf16.mxu0 0
    %192 = vmatpush1.bf16.msra.mxu0 0
    %193 = vmatprep.subr.bf16.mxu0 0
    %194 = vmatpush1.bf16.msra.mxu0 0
    %195 = vmatprep.subr.bf16.mxu0 0
    %196 = vmatpush1.bf16.msra.mxu0 %v179
    %197 = vmatprep.subr.bf16.mxu0 0
    %198 = vmatpush2.bf16.msra.mxu0 0
    %199 = vmatprep.subr.bf16.mxu0 0
    %200 = vmatpush2.bf16.msra.mxu0 0
    %201 = vmatprep.subr.bf16.mxu0 0
    %202 = vmatpush2.bf16.msra.mxu0 0
    %203 = vmatprep.subr.bf16.mxu0 0
    %204 = vmatpush2.bf16.msra.mxu0 0
    %205 = vmatprep.subr.bf16.mxu0 0
    %206 = vmatpush2.bf16.msra.mxu0 0
    %207 = vmatprep.subr.bf16.mxu0 0
    %208 = vmatpush2.bf16.msra.mxu0 0
    %209 = vmatprep.subr.bf16.mxu0 0
    %210 = vmatpush2.bf16.msra.mxu0 0
    %211 = vmatprep.subr.bf16.mxu0 0
    %212 = vmatpush2.bf16.msra.mxu0 0
    %213 = vmatprep.mubr.bf16.mxu0 0
    %214 = vmatmul.mubr.bf16.gmra.mxu0 %v175
    %v215 = vpop.f32.mrf.mxu0
    %v216 = vadd.f32 0.0, %v215
    %v217 = vpop.f32.mrf.mxu0
    %v218 = vpop.f32.mrf.mxu0
    %v219 = vpop.f32.mrf.mxu0
    %220 = vdwg.mxu0
    %v221 = vunpack.c.l.bf16 %v91
    %v222 = vadd.f32 %v221, %v216
    %v223 = vpack.c.bf16 %v222, %v222
    %v224 = vld [vmem:[%s6] sm:$0xf]
    %v225 = vld [vmem:[%s6 + $0x4] sm:$0xf]
    %v226 = vld [vmem:[%s6 + $0x8] sm:$0xf]
    %v227 = vld [vmem:[%s6 + $0xc] sm:$0xf]
    %v228 = vld [vmem:[%s7] sm:$0x1]
    %v230 = vlaneseq
    %v231 = vshrl.u32 %v230, 7
    %v232 = vsub.s32 0, %v231
    %v233 = vrot.slane %v228, %v232
    %v239 = vunpack.c.l.b16 %v224
    %v240 = vunpack.c.l.b16 %v225
    %v241 = vunpack.c.l.b16 %v226
    %v242 = vunpack.c.l.b16 %v227
    %v243 = vpack.c.b16 %v240, %v239
    %v244 = vpack.c.b16 %v242, %v241
    %v248 = vsel %vm115, %v223, 0
    %250 = vmatprep.subr.bf16.mxu0 0
    %251 = vmatpush1.bf16.msra.mxu0 0
    %252 = vmatprep.subr.bf16.mxu0 0
    %253 = vmatpush1.bf16.msra.mxu0 0
    %254 = vmatprep.subr.bf16.mxu0 0
    %255 = vmatpush1.bf16.msra.mxu0 0
    %256 = vmatprep.subr.bf16.mxu0 0
    %257 = vmatpush1.bf16.msra.mxu0 0
    %258 = vmatprep.subr.bf16.mxu0 0
    %259 = vmatpush1.bf16.msra.mxu0 0
    %260 = vmatprep.subr.bf16.mxu0 0
    %261 = vmatpush1.bf16.msra.mxu0 0
    %262 = vmatprep.subr.bf16.mxu0 0
    %263 = vmatpush1.bf16.msra.mxu0 %v244
    %264 = vmatprep.subr.bf16.mxu0 0
    %265 = vmatpush1.bf16.msra.mxu0 %v243
    %266 = vmatprep.subr.bf16.mxu0 0
    %267 = vmatpush2.bf16.msra.mxu0 0
    %268 = vmatprep.subr.bf16.mxu0 0
    %269 = vmatpush2.bf16.msra.mxu0 0
    %270 = vmatprep.subr.bf16.mxu0 0
    %271 = vmatpush2.bf16.msra.mxu0 0
    %272 = vmatprep.subr.bf16.mxu0 0
    %273 = vmatpush2.bf16.msra.mxu0 0
    %274 = vmatprep.subr.bf16.mxu0 0
    %275 = vmatpush2.bf16.msra.mxu0 0
    %276 = vmatprep.subr.bf16.mxu0 0
    %277 = vmatpush2.bf16.msra.mxu0 0
    %278 = vmatprep.subr.bf16.mxu0 0
    %279 = vmatpush2.bf16.msra.mxu0 0
    %280 = vmatprep.subr.bf16.mxu0 0
    %281 = vmatpush2.bf16.msra.mxu0 0
    %282 = vmatprep.mubr.bf16.mxu0 0
    %283 = vmatmul.mubr.bf16.gmra.mxu0 %v248
    %v284 = vpop.f32.mrf.mxu0
    %v285 = vadd.f32 %v233, %v284
    %v286 = vpop.f32.mrf.mxu0
    %v287 = vpop.f32.mrf.mxu0
    %v288 = vpop.f32.mrf.mxu0
    %289 = vdwg.mxu0
    %v290 = vpack.c.bf16 %v285, %v285
    %v291 = vld [vmem:[%s8] sm:$0xf]
    %v292 = vld [vmem:[%s8 + $0x4] sm:$0xf]
    %v293 = vld [vmem:[%s8 + $0x8] sm:$0xf]
    %v294 = vld [vmem:[%s8 + $0xc] sm:$0xf]
    %v295 = vld [vmem:[%s9] sm:$0x1]
    %v297 = vlaneseq
    %v298 = vshrl.u32 %v297, 7
    %v299 = vsub.s32 0, %v298
    %v300 = vrot.slane %v295, %v299
    %v306 = vunpack.c.l.b16 %v291
    %v307 = vunpack.c.l.b16 %v292
    %v308 = vunpack.c.l.b16 %v293
    %v309 = vunpack.c.l.b16 %v294
    %v310 = vpack.c.b16 %v307, %v306
    %v311 = vpack.c.b16 %v309, %v308
    %v315 = vsel %vm115, %v290, 0
    %317 = vmatprep.subr.bf16.mxu0 0
    %318 = vmatpush1.bf16.msra.mxu0 0
    %319 = vmatprep.subr.bf16.mxu0 0
    %320 = vmatpush1.bf16.msra.mxu0 0
    %321 = vmatprep.subr.bf16.mxu0 0
    %322 = vmatpush1.bf16.msra.mxu0 0
    %323 = vmatprep.subr.bf16.mxu0 0
    %324 = vmatpush1.bf16.msra.mxu0 0
    %325 = vmatprep.subr.bf16.mxu0 0
    %326 = vmatpush1.bf16.msra.mxu0 0
    %327 = vmatprep.subr.bf16.mxu0 0
    %328 = vmatpush1.bf16.msra.mxu0 0
    %329 = vmatprep.subr.bf16.mxu0 0
    %330 = vmatpush1.bf16.msra.mxu0 %v311
    %331 = vmatprep.subr.bf16.mxu0 0
    %332 = vmatpush1.bf16.msra.mxu0 %v310
    %333 = vmatprep.subr.bf16.mxu0 0
    %334 = vmatpush2.bf16.msra.mxu0 0
    %335 = vmatprep.subr.bf16.mxu0 0
    %336 = vmatpush2.bf16.msra.mxu0 0
    %337 = vmatprep.subr.bf16.mxu0 0
    %338 = vmatpush2.bf16.msra.mxu0 0
    %339 = vmatprep.subr.bf16.mxu0 0
    %340 = vmatpush2.bf16.msra.mxu0 0
    %341 = vmatprep.subr.bf16.mxu0 0
    %342 = vmatpush2.bf16.msra.mxu0 0
    %343 = vmatprep.subr.bf16.mxu0 0
    %344 = vmatpush2.bf16.msra.mxu0 0
    %345 = vmatprep.subr.bf16.mxu0 0
    %346 = vmatpush2.bf16.msra.mxu0 0
    %347 = vmatprep.subr.bf16.mxu0 0
    %348 = vmatpush2.bf16.msra.mxu0 0
    %349 = vmatprep.mubr.bf16.mxu0 0
    %350 = vmatmul.mubr.bf16.gmra.mxu0 %v315
    %v351 = vpop.f32.mrf.mxu0
    %v352 = vadd.f32 %v300, %v351
    %v353 = vpop.f32.mrf.mxu0
    %v354 = vpop.f32.mrf.mxu0
    %v355 = vpop.f32.mrf.mxu0
    %356 = vdwg.mxu0
    %v357 = vmax.f32 %v352, 0.0
    %v358 = vpack.c.bf16 %v357, %v357
    %v359 = vld [vmem:[%s10] sm:$0xf]
    %v360 = vld [vmem:[%s10 + $0x4] sm:$0xf]
    %v361 = vld [vmem:[%s10 + $0x8] sm:$0xf]
    %v362 = vld [vmem:[%s10 + $0xc] sm:$0xf]
    %v363 = vld [vmem:[%s11] sm:$0x1]
    %v365 = vlaneseq
    %v366 = vshrl.u32 %v365, 7
    %v367 = vsub.s32 0, %v366
    %v368 = vrot.slane %v363, %v367
    %v374 = vunpack.c.l.b16 %v359
    %v375 = vunpack.c.l.b16 %v360
    %v376 = vunpack.c.l.b16 %v361
    %v377 = vunpack.c.l.b16 %v362
    %v378 = vpack.c.b16 %v375, %v374
    %v379 = vpack.c.b16 %v377, %v376
    %v383 = vsel %vm115, %v358, 0
    %385 = vmatprep.subr.bf16.mxu0 0
    %386 = vmatpush1.bf16.msra.mxu0 0
    %387 = vmatprep.subr.bf16.mxu0 0
    %388 = vmatpush1.bf16.msra.mxu0 0
    %389 = vmatprep.subr.bf16.mxu0 0
    %390 = vmatpush1.bf16.msra.mxu0 0
    %391 = vmatprep.subr.bf16.mxu0 0
    %392 = vmatpush1.bf16.msra.mxu0 0
    %393 = vmatprep.subr.bf16.mxu0 0
    %394 = vmatpush1.bf16.msra.mxu0 0
    %395 = vmatprep.subr.bf16.mxu0 0
    %396 = vmatpush1.bf16.msra.mxu0 0
    %397 = vmatprep.subr.bf16.mxu0 0
    %398 = vmatpush1.bf16.msra.mxu0 %v379
    %399 = vmatprep.subr.bf16.mxu0 0
    %400 = vmatpush1.bf16.msra.mxu0 %v378
    %401 = vmatprep.subr.bf16.mxu0 0
    %402 = vmatpush2.bf16.msra.mxu0 0
    %403 = vmatprep.subr.bf16.mxu0 0
    %404 = vmatpush2.bf16.msra.mxu0 0
    %405 = vmatprep.subr.bf16.mxu0 0
    %406 = vmatpush2.bf16.msra.mxu0 0
    %407 = vmatprep.subr.bf16.mxu0 0
    %408 = vmatpush2.bf16.msra.mxu0 0
    %409 = vmatprep.subr.bf16.mxu0 0
    %410 = vmatpush2.bf16.msra.mxu0 0
    %411 = vmatprep.subr.bf16.mxu0 0
    %412 = vmatpush2.bf16.msra.mxu0 0
    %413 = vmatprep.subr.bf16.mxu0 0
    %414 = vmatpush2.bf16.msra.mxu0 0
    %415 = vmatprep.subr.bf16.mxu0 0
    %416 = vmatpush2.bf16.msra.mxu0 0
    %417 = vmatprep.mubr.bf16.mxu0 0
    %418 = vmatmul.mubr.bf16.gmra.mxu0 %v383
    %v419 = vpop.f32.mrf.mxu0
    %v420 = vadd.f32 %v368, %v419
    %v421 = vpop.f32.mrf.mxu0
    %v422 = vpop.f32.mrf.mxu0
    %v423 = vpop.f32.mrf.mxu0
    %424 = vdwg.mxu0
    %v425 = vmax.f32 %v420, 0.0
    %426 = vst.msk [vmem:[#allocation7] sm:$0x3] %vm159, %v425
    %v427 = vld [vmem:[#allocation5] sm:$0x1]
    %v428 = vld [vmem:[%s12] sm:$0xf]
    %v429 = vld [vmem:[%s12 + $0x4] sm:$0xf]
    %v430 = vld [vmem:[%s12 + $0x8] sm:$0xf]
    %v431 = vld [vmem:[%s12 + $0xc] sm:$0xf]
    %v432 = vld [vmem:[%s13] sm:$0x1]
    %v434 = vlaneseq
    %v435 = vshrl.u32 %v434, 7
    %v436 = vsub.s32 0, %v435
    %v437 = vrot.slane %v432, %v436
    %v443 = vunpack.c.l.b16 %v428
    %v444 = vunpack.c.l.b16 %v429
    %v445 = vunpack.c.l.b16 %v430
    %v446 = vunpack.c.l.b16 %v431
    %v447 = vpack.c.b16 %v444, %v443
    %v448 = vpack.c.b16 %v446, %v445
    %v452 = vsel %vm115, %v427, 0
    %454 = vmatprep.subr.bf16.mxu0 0
    %455 = vmatpush1.bf16.msra.mxu0 0
    %456 = vmatprep.subr.bf16.mxu0 0
    %457 = vmatpush1.bf16.msra.mxu0 0
    %458 = vmatprep.subr.bf16.mxu0 0
    %459 = vmatpush1.bf16.msra.mxu0 0
    %460 = vmatprep.subr.bf16.mxu0 0
    %461 = vmatpush1.bf16.msra.mxu0 0
    %462 = vmatprep.subr.bf16.mxu0 0
    %463 = vmatpush1.bf16.msra.mxu0 0
    %464 = vmatprep.subr.bf16.mxu0 0
    %465 = vmatpush1.bf16.msra.mxu0 0
    %466 = vmatprep.subr.bf16.mxu0 0
    %467 = vmatpush1.bf16.msra.mxu0 %v448
    %468 = vmatprep.subr.bf16.mxu0 0
    %469 = vmatpush1.bf16.msra.mxu0 %v447
    %470 = vmatprep.subr.bf16.mxu0 0
    %471 = vmatpush2.bf16.msra.mxu0 0
    %472 = vmatprep.subr.bf16.mxu0 0
    %473 = vmatpush2.bf16.msra.mxu0 0
    %474 = vmatprep.subr.bf16.mxu0 0
    %475 = vmatpush2.bf16.msra.mxu0 0
    %476 = vmatprep.subr.bf16.mxu0 0
    %477 = vmatpush2.bf16.msra.mxu0 0
    %478 = vmatprep.subr.bf16.mxu0 0
    %479 = vmatpush2.bf16.msra.mxu0 0
    %480 = vmatprep.subr.bf16.mxu0 0
    %481 = vmatpush2.bf16.msra.mxu0 0
    %482 = vmatprep.subr.bf16.mxu0 0
    %483 = vmatpush2.bf16.msra.mxu0 0
    %484 = vmatprep.subr.bf16.mxu0 0
    %485 = vmatpush2.bf16.msra.mxu0 0
    %486 = vmatprep.mubr.bf16.mxu0 0
    %487 = vmatmul.mubr.bf16.gmra.mxu0 %v452
    %v488 = vpop.f32.mrf.mxu0
    %v489 = vadd.f32 %v437, %v488
    %v490 = vpop.f32.mrf.mxu0
    %v491 = vpop.f32.mrf.mxu0
    %v492 = vpop.f32.mrf.mxu0
    %493 = vdwg.mxu0
    %v494 = vmax.f32 %v489, 0.0
    %v495 = vpack.c.bf16 %v494, %v494
    %v496 = vld [vmem:[%s14] sm:$0xf]
    %v497 = vld [vmem:[%s14 + $0x4] sm:$0xf]
    %v498 = vld [vmem:[%s14 + $0x8] sm:$0xf]
    %v499 = vld [vmem:[%s14 + $0xc] sm:$0xf]
    %v500 = vld [vmem:[%s15] sm:$0x1]
    %v502 = vlaneseq
    %v503 = vshrl.u32 %v502, 7
    %v504 = vsub.s32 0, %v503
    %v505 = vrot.slane %v500, %v504
    %v511 = vunpack.c.l.b16 %v496
    %v512 = vunpack.c.l.b16 %v497
    %v513 = vunpack.c.l.b16 %v498
    %v514 = vunpack.c.l.b16 %v499
    %v515 = vpack.c.b16 %v512, %v511
    %v516 = vpack.c.b16 %v514, %v513
    %v520 = vsel %vm115, %v495, 0
    %522 = vmatprep.subr.bf16.mxu0 0
    %523 = vmatpush1.bf16.msra.mxu0 0
    %524 = vmatprep.subr.bf16.mxu0 0
    %525 = vmatpush1.bf16.msra.mxu0 0
    %526 = vmatprep.subr.bf16.mxu0 0
    %527 = vmatpush1.bf16.msra.mxu0 0
    %528 = vmatprep.subr.bf16.mxu0 0
    %529 = vmatpush1.bf16.msra.mxu0 0
    %530 = vmatprep.subr.bf16.mxu0 0
    %531 = vmatpush1.bf16.msra.mxu0 0
    %532 = vmatprep.subr.bf16.mxu0 0
    %533 = vmatpush1.bf16.msra.mxu0 0
    %534 = vmatprep.subr.bf16.mxu0 0
    %535 = vmatpush1.bf16.msra.mxu0 %v516
    %536 = vmatprep.subr.bf16.mxu0 0
    %537 = vmatpush1.bf16.msra.mxu0 %v515
    %538 = vmatprep.subr.bf16.mxu0 0
    %539 = vmatpush2.bf16.msra.mxu0 0
    %540 = vmatprep.subr.bf16.mxu0 0
    %541 = vmatpush2.bf16.msra.mxu0 0
    %542 = vmatprep.subr.bf16.mxu0 0
    %543 = vmatpush2.bf16.msra.mxu0 0
    %544 = vmatprep.subr.bf16.mxu0 0
    %545 = vmatpush2.bf16.msra.mxu0 0
    %546 = vmatprep.subr.bf16.mxu0 0
    %547 = vmatpush2.bf16.msra.mxu0 0
    %548 = vmatprep.subr.bf16.mxu0 0
    %549 = vmatpush2.bf16.msra.mxu0 0
    %550 = vmatprep.subr.bf16.mxu0 0
    %551 = vmatpush2.bf16.msra.mxu0 0
    %552 = vmatprep.subr.bf16.mxu0 0
    %553 = vmatpush2.bf16.msra.mxu0 0
    %554 = vmatprep.mubr.bf16.mxu0 0
    %555 = vmatmul.mubr.bf16.gmra.mxu0 %v520
    %v556 = vpop.f32.mrf.mxu0
    %v557 = vadd.f32 %v505, %v556
    %v558 = vpop.f32.mrf.mxu0
    %v559 = vpop.f32.mrf.mxu0
    %v560 = vpop.f32.mrf.mxu0
    %561 = vdwg.mxu0
    %v562 = vmax.f32 %v557, 0.0
    %s563 = scalar_lea.vmem [#allocation7], 2
    %564 = vst.msk [vmem:[%s563] sm:$0x3] %vm159, %v562
    %v565 = vld [vmem:[%s1] sm:$0x1]
    %v566 = vld [vmem:[%s16] sm:$0xf]
    %v567 = vld [vmem:[%s16 + $0x4] sm:$0xf]
    %v568 = vld [vmem:[%s16 + $0x8] sm:$0xf]
    %v569 = vld [vmem:[%s16 + $0xc] sm:$0xf]
    %v570 = vld [vmem:[%s17] sm:$0x1]
    %v572 = vlaneseq
    %v573 = vshrl.u32 %v572, 7
    %v574 = vsub.s32 0, %v573
    %v575 = vrot.slane %v570, %v574
    %v581 = vunpack.c.l.b16 %v566
    %v582 = vunpack.c.l.b16 %v567
    %v583 = vunpack.c.l.b16 %v568
    %v584 = vunpack.c.l.b16 %v569
    %v585 = vpack.c.b16 %v582, %v581
    %v586 = vpack.c.b16 %v584, %v583
    %v590 = vsel %vm115, %v565, 0
    %592 = vmatprep.subr.bf16.mxu0 0
    %593 = vmatpush1.bf16.msra.mxu0 0
    %594 = vmatprep.subr.bf16.mxu0 0
    %595 = vmatpush1.bf16.msra.mxu0 0
    %596 = vmatprep.subr.bf16.mxu0 0
    %597 = vmatpush1.bf16.msra.mxu0 0
    %598 = vmatprep.subr.bf16.mxu0 0
    %599 = vmatpush1.bf16.msra.mxu0 0
    %600 = vmatprep.subr.bf16.mxu0 0
    %601 = vmatpush1.bf16.msra.mxu0 0
    %602 = vmatprep.subr.bf16.mxu0 0
    %603 = vmatpush1.bf16.msra.mxu0 0
    %604 = vmatprep.subr.bf16.mxu0 0
    %605 = vmatpush1.bf16.msra.mxu0 %v586
    %606 = vmatprep.subr.bf16.mxu0 0
    %607 = vmatpush1.bf16.msra.mxu0 %v585
    %608 = vmatprep.subr.bf16.mxu0 0
    %609 = vmatpush2.bf16.msra.mxu0 0
    %610 = vmatprep.subr.bf16.mxu0 0
    %611 = vmatpush2.bf16.msra.mxu0 0
    %612 = vmatprep.subr.bf16.mxu0 0
    %613 = vmatpush2.bf16.msra.mxu0 0
    %614 = vmatprep.subr.bf16.mxu0 0
    %615 = vmatpush2.bf16.msra.mxu0 0
    %616 = vmatprep.subr.bf16.mxu0 0
    %617 = vmatpush2.bf16.msra.mxu0 0
    %618 = vmatprep.subr.bf16.mxu0 0
    %619 = vmatpush2.bf16.msra.mxu0 0
    %620 = vmatprep.subr.bf16.mxu0 0
    %621 = vmatpush2.bf16.msra.mxu0 0
    %622 = vmatprep.subr.bf16.mxu0 0
    %623 = vmatpush2.bf16.msra.mxu0 0
    %624 = vmatprep.mubr.bf16.mxu0 0
    %625 = vmatmul.mubr.bf16.gmra.mxu0 %v590
    %v626 = vpop.f32.mrf.mxu0
    %v627 = vadd.f32 %v575, %v626
    %v628 = vpop.f32.mrf.mxu0
    %v629 = vpop.f32.mrf.mxu0
    %v630 = vpop.f32.mrf.mxu0
    %631 = vdwg.mxu0
    %v632 = vmax.f32 %v627, 0.0
    %v633 = vpack.c.bf16 %v632, %v632
    %v634 = vld [vmem:[%s18] sm:$0xf]
    %v635 = vld [vmem:[%s18 + $0x4] sm:$0xf]
    %v636 = vld [vmem:[%s18 + $0x8] sm:$0xf]
    %v637 = vld [vmem:[%s18 + $0xc] sm:$0xf]
    %v638 = vld [vmem:[%s19] sm:$0x1]
    %v640 = vlaneseq
    %v641 = vshrl.u32 %v640, 7
    %v642 = vsub.s32 0, %v641
    %v643 = vrot.slane %v638, %v642
    %v649 = vunpack.c.l.b16 %v634
    %v650 = vunpack.c.l.b16 %v635
    %v651 = vunpack.c.l.b16 %v636
    %v652 = vunpack.c.l.b16 %v637
    %v653 = vpack.c.b16 %v650, %v649
    %v654 = vpack.c.b16 %v652, %v651
    %v658 = vsel %vm115, %v633, 0
    %660 = vmatprep.subr.bf16.mxu0 0
    %661 = vmatpush1.bf16.msra.mxu0 0
    %662 = vmatprep.subr.bf16.mxu0 0
    %663 = vmatpush1.bf16.msra.mxu0 0
    %664 = vmatprep.subr.bf16.mxu0 0
    %665 = vmatpush1.bf16.msra.mxu0 0
    %666 = vmatprep.subr.bf16.mxu0 0
    %667 = vmatpush1.bf16.msra.mxu0 0
    %668 = vmatprep.subr.bf16.mxu0 0
    %669 = vmatpush1.bf16.msra.mxu0 0
    %670 = vmatprep.subr.bf16.mxu0 0
    %671 = vmatpush1.bf16.msra.mxu0 0
    %672 = vmatprep.subr.bf16.mxu0 0
    %673 = vmatpush1.bf16.msra.mxu0 %v654
    %674 = vmatprep.subr.bf16.mxu0 0
    %675 = vmatpush1.bf16.msra.mxu0 %v653
    %676 = vmatprep.subr.bf16.mxu0 0
    %677 = vmatpush2.bf16.msra.mxu0 0
    %678 = vmatprep.subr.bf16.mxu0 0
    %679 = vmatpush2.bf16.msra.mxu0 0
    %680 = vmatprep.subr.bf16.mxu0 0
    %681 = vmatpush2.bf16.msra.mxu0 0
    %682 = vmatprep.subr.bf16.mxu0 0
    %683 = vmatpush2.bf16.msra.mxu0 0
    %684 = vmatprep.subr.bf16.mxu0 0
    %685 = vmatpush2.bf16.msra.mxu0 0
    %686 = vmatprep.subr.bf16.mxu0 0
    %687 = vmatpush2.bf16.msra.mxu0 0
    %688 = vmatprep.subr.bf16.mxu0 0
    %689 = vmatpush2.bf16.msra.mxu0 0
    %690 = vmatprep.subr.bf16.mxu0 0
    %691 = vmatpush2.bf16.msra.mxu0 0
    %692 = vmatprep.mubr.bf16.mxu0 0
    %693 = vmatmul.mubr.bf16.gmra.mxu0 %v658
    %v694 = vpop.f32.mrf.mxu0
    %v695 = vadd.f32 %v643, %v694
    %v696 = vpop.f32.mrf.mxu0
    %v697 = vpop.f32.mrf.mxu0
    %v698 = vpop.f32.mrf.mxu0
    %699 = vdwg.mxu0
    %v700 = vmax.f32 %v695, 0.0
    %s701 = scalar_lea.vmem [#allocation7], 4
    %702 = vst.msk [vmem:[%s701] sm:$0x3] %vm159, %v700
    // Predicated region
    $region90: #{tpu_custom_call.1} parent=1 // pred_check
      _
    $region91: #{tpu_custom_call.1} parent=1 // pred_check_branch
      %704 = sbr.rel (0) target = $region93
    $region92: #{tpu_custom_call.1} parent=1 // pred_region
      %s706 = ssub.s32 96, 96
      %707 = vsyncadd [#allocation4], %s706
      %s708 = sshll.u32 [#allocation7], 4
      %s709 = int_to_ptr.vmem [resolvable:$true] %s708
      %714 = dma.vmem_to_hbm [thread:$0]  %s709, 96, %s20, [#allocation4], 32, 32, 2
    $region93: #{tpu_custom_call.1} parent=1 // pred_fallthru
      _
    // Predicated region
    $region94: #{tpu_custom_call.1} parent=1 // pred_check
      _
    $region95: #{tpu_custom_call.1} parent=1 // pred_check_branch
      %716 = sbr.rel (0) target = $region97
    $region96: #{tpu_custom_call.1} parent=1 // pred_region
      %717 = dma.done [#allocation4], 96
    $region97: #{tpu_custom_call.1} parent=1 // pred_fallthru
      _
    %718 = vsyncpa [#allocation3], 1
    %719 = vsyncpa [#allocation6], 1
    %720 = vsyncpa [#allocation4], 1

</llo_original>
